<compile_context>
chip_gen: v7x
topology: tpu7x:2x2x1
jax: 0.10.0
libtpu: 0.0.40
codegen_flags: <defaults>
</compile_context>

<pallas_src>
import math

import jax
import jax.numpy as jnp
from jax.experimental import pallas as pl
from jax.experimental.pallas import tpu as pltpu


def _round_up(x, m):
    return ((x + m - 1) // m) * m


def _fused_mlp_kernel(x_ref, w1_ref, b1_ref, w2_ref, b2_ref, o_ref):
    # relu(x @ W1 + b1) @ W2 + b2 — fully fused; hidden stays in vregs/VMEM.
    # x/w1/w2 are bf16; accumulation, bias adds and ReLU stay f32; output is
    # f32 to match the PyTorch module.
    h = jnp.dot(x_ref[...], w1_ref[...], preferred_element_type=jnp.float32)
    h = jnp.maximum(h + b1_ref[...], 0.0)
    y = jnp.dot(h.astype(w2_ref.dtype), w2_ref[...],
                preferred_element_type=jnp.float32)
    # NOTE: output lane width C=10 < 128 -> masked stores; left as-is since
    # HBM writeback (not the store slot) is what matters at these shapes.
    o_ref[...] = (y + b2_ref[...]).astype(o_ref.dtype)


def _choose_tm(M, *, max_tm=1024, target_grid=2, min_tm=256):
    """Row-tile size: big tiles (512-1024 rows hit ~85% of HBM roofline), but
    keep >= `target_grid` grid steps when M is large so the "parallel" axis
    shards across both TensorCores on v7x. Tiny M gets a single tile (it is
    launch/DMA-latency bound anyway)."""
    if M <= min_tm:
        return _round_up(M, 8)
    tm = min(max_tm, _round_up(pl.cdiv(M, target_grid), 8))
    return max(tm, min_tm)


def pallas_readout_mlp(x, w1, b1, w2, b2, *, max_tm=1024):
    """y = relu(x @ w1 + b1) @ w2 + b2 in a single fused pallas_call.

    x: (M, H)   w1: (H, H)   b1: (H,)   w2: (H, C)   b2: (C,)
    Returns (M, C) float32.
    """
    M, H = x.shape
    C = w2.shape[1]

    # TODO(synk): if h_dims ever grows so the resident f32/bf16 (H,H) weight
    # nears the VMEM budget (64 MiB/TC on v7x, 16/32 MiB scoped defaults),
    # switch to a K-tiled "arbitrary" axis with an f32 VMEM accumulator and
    # set vmem_limit_bytes explicitly. Moot at H=32.

    compute_dtype = jnp.bfloat16
    x = x.astype(compute_dtype)
    w1 = w1.astype(compute_dtype)
    w2 = w2.astype(compute_dtype)
    b1 = b1.astype(jnp.float32).reshape(1, H)
    b2 = b2.astype(jnp.float32).reshape(1, C)

    tm = _choose_tm(M, max_tm=max_tm)
    grid = (pl.cdiv(M, tm),)

    # Ragged last block instead of jnp.pad + out[:M]: Pallas masks the
    # out-of-bounds rows on store, and the MLP is row-independent so garbage
    # read into the padded input rows never contaminates real rows.
    return pl.pallas_call(
        _fused_mlp_kernel,
        out_shape=jax.ShapeDtypeStruct((M, C), jnp.float32),
        grid=grid,
        in_specs=[
            pl.BlockSpec((tm, H), lambda i: (i, 0)),
            pl.BlockSpec((H, H), lambda i: (0, 0)),
            pl.BlockSpec((1, H), lambda i: (0, 0)),
            pl.BlockSpec((H, C), lambda i: (0, 0)),
            pl.BlockSpec((1, C), lambda i: (0, 0)),
        ],
        out_specs=pl.BlockSpec((tm, C), lambda i: (i, 0)),
        compiler_params=pltpu.CompilerParams(
            dimension_semantics=("parallel",)),
    )(x, w1, b1, w2, b2)


def readout_forward(params, node_states, edge_states=None):
    """ReadoutModule.forward: stack node hidden states and apply f_out."""
    # TODO(synk): the list-of-dicts traversal has no Pallas equivalent; it is
    # host-side pytree glue (one jnp.stack).
    # Stack along axis 0 (contiguous concat of the wide H=32 operand, with the
    # bf16 cast fused into the copy); undo the (N,B)<->(B,N) ordering on the
    # small (...,C) output instead.
    hids = jnp.stack([s["a"][0].astype(jnp.bfloat16) for s in node_states],
                     axis=0)                          # (N, B, H)
    N, B, H = hids.shape
    (w1, b1), (w2, b2) = params["f_out"]
    y = pallas_readout_mlp(hids.reshape(N * B, H), w1, b1, w2, b2)
    return jnp.transpose(y.reshape(N, B, -1), (1, 0, 2))   # (B, N, C)


def init_params(key, h_dims, n_classes):
    def linear_init(k, din, dout):
        bound = 1.0 / math.sqrt(din)          # PyTorch nn.Linear default init
        kw_, kb_ = jax.random.split(k)
        w = jax.random.uniform(kw_, (din, dout), jnp.float32, -bound, bound)
        b = jax.random.uniform(kb_, (dout,), jnp.float32, -bound, bound)
        return w, b

    k1, k2 = jax.random.split(key)
    return {"f_out": [linear_init(k1, h_dims, h_dims),
                      linear_init(k2, h_dims, n_classes)]}


if __name__ == "__main__":
    key = jax.random.PRNGKey(0)

    batch = 2
    n_nodes = 8          # number of node states being stacked on dim 1
    h_dims = 32
    g_dims = 6           # size of a[1] (unused by ReadoutModule)
    n_classes = 10

    k_param, *k_nodes = jax.random.split(key, 1 + n_nodes)
    params = init_params(k_param, h_dims, n_classes)

    # Synthetic node states: each carries 'a' = (hidden, glimpse-params) like
    # the upstream module's output; ReadoutModule only reads a[0].
    node_states = []
    for kn in k_nodes:
        kh, kb = jax.random.split(kn)
        node_states.append({
            "a": (jax.random.normal(kh, (batch, h_dims), jnp.float32),
                  jax.random.normal(kb, (batch, g_dims), jnp.float32)),
        })
    edge_states = []

    out = readout_forward(params, node_states, edge_states)
    jax.block_until_ready(out)

    # pure-JAX f32 reference check (bf16 operands keep us well within 2e-2)
    hids = jnp.stack([s["a"][0] for s in node_states], axis=1)
    (w1, b1), (w2, b2) = params["f_out"]
    ref = jnp.maximum(hids @ w1 + b1, 0.0) @ w2 + b2

    assert out.shape == (batch, n_nodes, n_classes)
    assert bool(jnp.all(jnp.isfinite(out)))
    assert bool(jnp.allclose(out, ref, atol=2e-2, rtol=2e-2))
    print("KERNEL_OK")
</pallas_src>

<mosaic_0001>
module attributes {stable_mosaic.version = 11 : i64} {
  func.func @_fused_mlp_kernel(%arg0: i32, %arg1: memref<16x32xbf16, #tpu.memory_space<vmem>>, %arg2: memref<32x32xbf16, #tpu.memory_space<vmem>>, %arg3: memref<1x32xf32, #tpu.memory_space<vmem>>, %arg4: memref<32x10xbf16, #tpu.memory_space<vmem>>, %arg5: memref<1x10xf32, #tpu.memory_space<vmem>>, %arg6: memref<16x10xf32, #tpu.memory_space<vmem>>) attributes {dimension_semantics = [#tpu.dimension_semantics<parallel>], iteration_bounds = array<i64: 1>, scalar_prefetch = 0 : i64, scratch_operands = 0 : i64, tpu.core_type = #tpu.core_type<tc>, window_params = [{transform_indices = @transform_0, window_bounds = array<i64: 16, 32>}, {pipeline_mode = #tpu.pipeline_mode<synchronous>, transform_indices = @transform_1, window_bounds = array<i64: 32, 32>}, {pipeline_mode = #tpu.pipeline_mode<synchronous>, transform_indices = @transform_2, window_bounds = array<i64: 1, 32>}, {pipeline_mode = #tpu.pipeline_mode<synchronous>, transform_indices = @transform_3, window_bounds = array<i64: 32, 10>}, {pipeline_mode = #tpu.pipeline_mode<synchronous>, transform_indices = @transform_4, window_bounds = array<i64: 1, 10>}, {transform_indices = @transform_5, window_bounds = array<i64: 16, 10>}]} {
    %c0 = arith.constant 0 : index
    %c0_0 = arith.constant 0 : index
    %0 = vector.load %arg1[%c0, %c0_0] : memref<16x32xbf16, #tpu.memory_space<vmem>>, vector<16x32xbf16>
    %c0_1 = arith.constant 0 : index
    %c0_2 = arith.constant 0 : index
    %1 = vector.load %arg2[%c0_1, %c0_2] : memref<32x32xbf16, #tpu.memory_space<vmem>>, vector<32x32xbf16>
    %cst = arith.constant dense<0.000000e+00> : vector<16x32xf32>
    %2 = tpu.matmul %0, %1, %cst {dimension_numbers = #tpu.dot_dimension_numbers<[1], [0], [0], [1], [0, 0, 1, 1], [], []>} : vector<16x32xbf16>, vector<32x32xbf16>, vector<16x32xf32> -> vector<16x32xf32>
    %c0_3 = arith.constant 0 : index
    %c0_4 = arith.constant 0 : index
    %3 = vector.load %arg3[%c0_3, %c0_4] : memref<1x32xf32, #tpu.memory_space<vmem>>, vector<1x32xf32>
    %4 = vector.broadcast %3 : vector<1x32xf32> to vector<16x32xf32>
    %5 = arith.addf %2, %4 : vector<16x32xf32>
    %cst_5 = arith.constant 0.000000e+00 : f32
    %6 = vector.broadcast %cst_5 : f32 to vector<16x32xf32>
    %7 = arith.maximumf %5, %6 : vector<16x32xf32>
    %8 = arith.truncf %7 : vector<16x32xf32> to vector<16x32xbf16>
    %c0_6 = arith.constant 0 : index
    %c0_7 = arith.constant 0 : index
    %9 = vector.load %arg4[%c0_6, %c0_7] : memref<32x10xbf16, #tpu.memory_space<vmem>>, vector<32x10xbf16>
    %cst_8 = arith.constant dense<0.000000e+00> : vector<16x10xf32>
    %10 = tpu.matmul %8, %9, %cst_8 {dimension_numbers = #tpu.dot_dimension_numbers<[1], [0], [0], [1], [0, 0, 1, 1], [], []>} : vector<16x32xbf16>, vector<32x10xbf16>, vector<16x10xf32> -> vector<16x10xf32>
    %c0_9 = arith.constant 0 : index
    %c0_10 = arith.constant 0 : index
    %11 = vector.load %arg5[%c0_9, %c0_10] : memref<1x10xf32, #tpu.memory_space<vmem>>, vector<1x10xf32>
    %12 = vector.broadcast %11 : vector<1x10xf32> to vector<16x10xf32>
    %13 = arith.addf %10, %12 : vector<16x10xf32>
    %c0_11 = arith.constant 0 : index
    %c0_12 = arith.constant 0 : index
    %14 = vector.load %arg6[%c0_11, %c0_12] : memref<16x10xf32, #tpu.memory_space<vmem>>, vector<16x10xf32>
    tpu.vector_store %arg6[%c0_11, %c0_12], %13 {strides = array<i32>} : memref<16x10xf32, #tpu.memory_space<vmem>>, vector<16x10xf32>,
    return
  }
  func.func @transform_0(%arg0: i32) -> (i32, i32) {
    %c0_i32 = arith.constant 0 : i32
    %c0_i32_0 = arith.constant 0 : i32
    return %arg0, %c0_i32 : i32, i32
  }
  func.func @transform_1(%arg0: i32) -> (i32, i32) {
    %c0_i32 = arith.constant 0 : i32
    %c0_i32_0 = arith.constant 0 : i32
    %c0_i32_1 = arith.constant 0 : i32
    return %c0_i32, %c0_i32_0 : i32, i32
  }
  func.func @transform_2(%arg0: i32) -> (i32, i32) {
    %c0_i32 = arith.constant 0 : i32
    %c0_i32_0 = arith.constant 0 : i32
    %c0_i32_1 = arith.constant 0 : i32
    return %c0_i32, %c0_i32_0 : i32, i32
  }
  func.func @transform_3(%arg0: i32) -> (i32, i32) {
    %c0_i32 = arith.constant 0 : i32
    %c0_i32_0 = arith.constant 0 : i32
    %c0_i32_1 = arith.constant 0 : i32
    return %c0_i32, %c0_i32_0 : i32, i32
  }
  func.func @transform_4(%arg0: i32) -> (i32, i32) {
    %c0_i32 = arith.constant 0 : i32
    %c0_i32_0 = arith.constant 0 : i32
    %c0_i32_1 = arith.constant 0 : i32
    return %c0_i32, %c0_i32_0 : i32, i32
  }
  func.func @transform_5(%arg0: i32) -> (i32, i32) {
    %c0_i32 = arith.constant 0 : i32
    %c0_i32_0 = arith.constant 0 : i32
    return %arg0, %c0_i32 : i32, i32
  }
}

</mosaic_0001>

<llo_original>
// kernel: tpu_custom_call.1
$region0: #{tpu_custom_call.1}
  #allocation0 [shape = 'u32[]', space=smem, size = 0x4, offset = 0x4, fixed_abs, tag = 'smem constant byte address 0x4 - core index']
  #allocation1 [shape = 'u32[144,128]{1,0:T(1,128)}', space=vmem, size = 0x12000, scoped, tag = 'internal scratch']
  %s0 = inlined_call_operand.vmem [shape: bf16[16,32], index: 0, kind: input, shape index: {}]
  %s1 = inlined_call_operand.vmem [shape: bf16[32,32], index: 1, kind: input, shape index: {}]
  %s2 = inlined_call_operand.vmem [shape: f32[1,32], index: 2, kind: input, shape index: {}]
  %s3 = inlined_call_operand.vmem [shape: bf16[32,10], index: 3, kind: input, shape index: {}]
  %s4 = inlined_call_operand.vmem [shape: f32[1,10], index: 4, kind: input, shape index: {}]
  %s5 = inlined_call_operand.hbm [shape: f32[16,10], index: 5, kind: output, shape index: {}]
  %s6 = sld [smem:[#allocation0]]
  $region30: #{tpu_custom_call.1} parent=0
    _
  %s8 = ssub.s32 1, %s6
  %s9 = scalar_select 0, %s8, %s6
  $region1: #{tpu_custom_call.1} parent=0
    #allocation2 [shape = 'u8[8192]{0}', space=vmem, size = 0x2000, scoped, tag = 'output window, operand 0, single buffered']
    #allocation3 [shape = 's32[1]{0}', space=sflag, size = 0x4, scoped, tag = 'scoped memory for tpu_custom_call.1']
    %10 = vsyncpa [#allocation3], 0
    // Predicated region
    $region2: #{tpu_custom_call.1} parent=1 // pred_check
      _
    $region3: #{tpu_custom_call.1} parent=1 // pred_check_branch
      %12 = sbr.rel (0) target = $region5
    $region4: #{tpu_custom_call.1} parent=1 // pred_region
      _
    $region5: #{tpu_custom_call.1} parent=1 // pred_fallthru
      _
    // Predicated region
    $region6: #{tpu_custom_call.1} parent=1 // pred_check
      _
    $region7: #{tpu_custom_call.1} parent=1 // pred_check_branch
      %14 = sbr.rel (0) target = $region9
    $region8: #{tpu_custom_call.1} parent=1 // pred_region
      _
    $region9: #{tpu_custom_call.1} parent=1 // pred_fallthru
      _
    // Predicated region
    $region10: #{tpu_custom_call.1} parent=1 // pred_check
      _
    $region11: #{tpu_custom_call.1} parent=1 // pred_check_branch
      %16 = sbr.rel (0) target = $region13
    $region12: #{tpu_custom_call.1} parent=1 // pred_region
      _
    $region13: #{tpu_custom_call.1} parent=1 // pred_fallthru
      _
    // Predicated region
    $region14: #{tpu_custom_call.1} parent=1 // pred_check
      _
    $region15: #{tpu_custom_call.1} parent=1 // pred_check_branch
      %18 = sbr.rel (0) target = $region17
    $region16: #{tpu_custom_call.1} parent=1 // pred_region
      _
    $region17: #{tpu_custom_call.1} parent=1 // pred_fallthru
      _
    // Predicated region
    $region18: #{tpu_custom_call.1} parent=1 // pred_check
      _
    $region19: #{tpu_custom_call.1} parent=1 // pred_check_branch
      %20 = sbr.rel (0) target = $region21
    $region20: #{tpu_custom_call.1} parent=1 // pred_region
      _
    $region21: #{tpu_custom_call.1} parent=1 // pred_fallthru
      _
    %v22 = vld [vmem:[%s0] sm:$0xf]
    %v23 = vld [vmem:[%s0 + $0x4] sm:$0xf]
    %v24 = vld [vmem:[%s1] sm:$0xf]
    %v25 = vld [vmem:[%s1 + $0x4] sm:$0xf]
    %v26 = vld [vmem:[%s1 + $0x8] sm:$0xf]
    %v27 = vld [vmem:[%s1 + $0xc] sm:$0xf]
    %v28 = vld [vmem:[%s2] sm:$0x1]
    %v30 = vlaneseq
    %v31 = vshrl.u32 %v30, 7
    %v32 = vsub.s32 0, %v31
    %v33 = vrot.slane %v28, %v32
    %v37 = vunpack.c.l.b16 %v22
    %v38 = vunpack.c.l.b16 %v23
    %v39 = vpack.c.b16 %v38, %v37
    %v44 = vunpack.c.l.b16 %v24
    %v45 = vunpack.c.l.b16 %v25
    %v46 = vunpack.c.l.b16 %v26
    %v47 = vunpack.c.l.b16 %v27
    %v48 = vpack.c.b16 %v45, %v44
    %v49 = vpack.c.b16 %v47, %v46
    %vm52 = vcmask 261120
    %v54 = vsel %vm52, %v39, 0
    %56 = vmatprep.subr.bf16.mxu0 0
    %57 = vmatpush1.bf16.msra.mxu0 %v48
    %58 = vmatprep.subr.bf16.mxu0 0
    %59 = vmatpush1.bf16.msra.mxu0 %v49
    %60 = vmatprep.subr.bf16.mxu0 0
    %61 = vmatpush1.bf16.msra.mxu0 0
    %62 = vmatprep.subr.bf16.mxu0 0
    %63 = vmatpush1.bf16.msra.mxu0 0
    %64 = vmatprep.subr.bf16.mxu0 0
    %65 = vmatpush1.bf16.msra.mxu0 0
    %66 = vmatprep.subr.bf16.mxu0 0
    %67 = vmatpush1.bf16.msra.mxu0 0
    %68 = vmatprep.subr.bf16.mxu0 0
    %69 = vmatpush1.bf16.msra.mxu0 0
    %70 = vmatprep.subr.bf16.mxu0 0
    %71 = vmatpush1.bf16.msra.mxu0 0
    %72 = vmatprep.subr.bf16.mxu0 0
    %73 = vmatpush1.bf16.msra.mxu0 0
    %74 = vmatprep.subr.bf16.mxu0 0
    %75 = vmatpush1.bf16.msra.mxu0 0
    %76 = vmatprep.subr.bf16.mxu0 0
    %77 = vmatpush1.bf16.msra.mxu0 0
    %78 = vmatprep.subr.bf16.mxu0 0
    %79 = vmatpush1.bf16.msra.mxu0 0
    %80 = vmatprep.subr.bf16.mxu0 0
    %81 = vmatpush1.bf16.msra.mxu0 0
    %82 = vmatprep.subr.bf16.mxu0 0
    %83 = vmatpush1.bf16.msra.mxu0 0
    %84 = vmatprep.subr.bf16.mxu0 0
    %85 = vmatpush1.bf16.msra.mxu0 0
    %86 = vmatprep.subr.bf16.mxu0 0
    %87 = vmatpush1.bf16.msra.mxu0 0
    %88 = vmatprep.mubr.bf16.mxu0 0
    %89 = vmatmul.mubr.bf16.gmra.mrb[0].mxu0 %v54
    %v90 = vpop.f32.mrb[0].mxu0
    %v91 = vadd.f32 %v33, %v90
    %v92 = vpop.f32.mrb[0].mxu0
    %v93 = vpop.f32.mrb[0].mxu0
    %v94 = vadd.f32 %v33, %v93
    %v95 = vpop.f32.mrb[0].mxu0
    %96 = vdwg.mxu0
    %v97 = vmax.f32 %v91, 0.0
    %v98 = vmax.f32 %v94, 0.0
    %v99 = vpack.c.bf16 %v98, %v97
    %v100 = vld [vmem:[%s3] sm:$0xf]
    %v101 = vld [vmem:[%s3 + $0x4] sm:$0xf]
    %v102 = vld [vmem:[%s3 + $0x8] sm:$0xf]
    %v103 = vld [vmem:[%s3 + $0xc] sm:$0xf]
    %v104 = vld [vmem:[%s4] sm:$0x1]
    %v106 = vlaneseq
    %v107 = vshrl.u32 %v106, 7
    %v108 = vsub.s32 0, %v107
    %v109 = vrot.slane %v104, %v108
    %v115 = vunpack.c.l.b16 %v100
    %v116 = vunpack.c.l.b16 %v101
    %v117 = vunpack.c.l.b16 %v102
    %v118 = vunpack.c.l.b16 %v103
    %v119 = vpack.c.b16 %v116, %v115
    %v120 = vpack.c.b16 %v118, %v117
    %v124 = vsel %vm52, %v99, 0
    %126 = vmatprep.subr.bf16.mxu0 0
    %127 = vmatpush1.bf16.msra.mxu0 %v119
    %128 = vmatprep.subr.bf16.mxu0 0
    %129 = vmatpush1.bf16.msra.mxu0 %v120
    %130 = vmatprep.subr.bf16.mxu0 0
    %131 = vmatpush1.bf16.msra.mxu0 0
    %132 = vmatprep.subr.bf16.mxu0 0
    %133 = vmatpush1.bf16.msra.mxu0 0
    %134 = vmatprep.subr.bf16.mxu0 0
    %135 = vmatpush1.bf16.msra.mxu0 0
    %136 = vmatprep.subr.bf16.mxu0 0
    %137 = vmatpush1.bf16.msra.mxu0 0
    %138 = vmatprep.subr.bf16.mxu0 0
    %139 = vmatpush1.bf16.msra.mxu0 0
    %140 = vmatprep.subr.bf16.mxu0 0
    %141 = vmatpush1.bf16.msra.mxu0 0
    %142 = vmatprep.subr.bf16.mxu0 0
    %143 = vmatpush1.bf16.msra.mxu0 0
    %144 = vmatprep.subr.bf16.mxu0 0
    %145 = vmatpush1.bf16.msra.mxu0 0
    %146 = vmatprep.subr.bf16.mxu0 0
    %147 = vmatpush1.bf16.msra.mxu0 0
    %148 = vmatprep.subr.bf16.mxu0 0
    %149 = vmatpush1.bf16.msra.mxu0 0
    %150 = vmatprep.subr.bf16.mxu0 0
    %151 = vmatpush1.bf16.msra.mxu0 0
    %152 = vmatprep.subr.bf16.mxu0 0
    %153 = vmatpush1.bf16.msra.mxu0 0
    %154 = vmatprep.subr.bf16.mxu0 0
    %155 = vmatpush1.bf16.msra.mxu0 0
    %156 = vmatprep.subr.bf16.mxu0 0
    %157 = vmatpush1.bf16.msra.mxu0 0
    %158 = vmatprep.mubr.bf16.mxu0 0
    %159 = vmatmul.mubr.bf16.gmra.mrb[0].mxu0 %v124
    %v160 = vpop.f32.mrb[0].mxu0
    %v161 = vadd.f32 %v109, %v160
    %v162 = vpop.f32.mrb[0].mxu0
    %v163 = vpop.f32.mrb[0].mxu0
    %v164 = vadd.f32 %v109, %v163
    %v165 = vpop.f32.mrb[0].mxu0
    %166 = vdwg.mxu0
    %vm167 = vcmask 80896
    %168 = vst.msk [vmem:[#allocation2] sm:$0xff] %vm167, %v161
    %169 = vst.msk [vmem:[#allocation2 + $0x8] sm:$0xff] %vm167, %v164
    // Predicated region
    $region22: #{tpu_custom_call.1} parent=1 // pred_check
      _
    $region23: #{tpu_custom_call.1} parent=1 // pred_check_branch
      %171 = sbr.rel (0) target = $region25
    $region24: #{tpu_custom_call.1} parent=1 // pred_region
      %s173 = ssub.s32 256, 256
      %174 = vsyncadd [#allocation3], %s173
      %s175 = sshll.u32 [#allocation2], 4
      %s176 = int_to_ptr.vmem [resolvable:$true] %s175
      %181 = dma.vmem_to_hbm [thread:$0]  %s176, 256, %s5, [#allocation3], 128, 128, 8
    $region25: #{tpu_custom_call.1} parent=1 // pred_fallthru
      _
    // Predicated region
    $region26: #{tpu_custom_call.1} parent=1 // pred_check
      _
    $region27: #{tpu_custom_call.1} parent=1 // pred_check_branch
      %183 = sbr.rel (0) target = $region29
    $region28: #{tpu_custom_call.1} parent=1 // pred_region
      %184 = dma.done [#allocation3], 256
    $region29: #{tpu_custom_call.1} parent=1 // pred_fallthru
      _
    %185 = vsyncpa [#allocation3], 1

</llo_original>
